<compile_context>
chip_gen: v7x
topology: tpu7x:2x2x1
jax: 0.10.0
libtpu: 0.0.40
codegen_flags: <defaults>
</compile_context>

<pallas_src>
import functools

import jax
import jax.numpy as jnp
from jax.experimental import pallas as pl
from jax.experimental.pallas import tpu as pltpu


def _round_up(x: int, m: int) -> int:
    return ((x + m - 1) // m) * m


# ----------------------------------------------------------------------------
# Kernel
# ----------------------------------------------------------------------------
def _zero_linear_kernel(x_ref, w_ref, b_ref, o_ref, *, precision):
    # x_ref: (tm, tk) feed-dtype   w_ref: (tk, tn) feed-dtype
    # b_ref: (1, tn)  f32          o_ref: (tm, tn) f32 (K-resident accumulator)
    k = pl.program_id(2)

    @pl.when(k == 0)
    def _seed_with_bias():
        # Seed the resident output tile with the bias once per (i, j) tile.
        o_ref[...] = jnp.broadcast_to(b_ref[...], o_ref.shape)

    # MXU matmul, f32 accumulate directly into the resident output tile.
    o_ref[...] += jnp.dot(
        x_ref[...], w_ref[...],
        preferred_element_type=jnp.float32,
        precision=precision,
    )


# ----------------------------------------------------------------------------
# One-time weight preparation (cache this; weights are static between calls)
# ----------------------------------------------------------------------------
def prepare_weight(weight, bias, *, input_dtype=jnp.bfloat16):
    """Transpose (Out, In) -> (K, Out), zero-pad K to a multiple of 128, cast.

    K MUST be zero-padded: garbage in the contraction axis would corrupt valid
    outputs (M / N edges are handled by masked partial blocks instead).
    """
    out_features, in_features = weight.shape
    k_pad = _round_up(max(in_features, 1), 128)
    w_t = jnp.zeros((k_pad, out_features), input_dtype)
    w_t = w_t.at[:in_features, :].set(weight.T.astype(input_dtype))
    b_row = bias.astype(jnp.float32).reshape(1, out_features)
    return w_t, b_row


# ----------------------------------------------------------------------------
# Tile selection
# ----------------------------------------------------------------------------
def _pick_tiles(rows, out_features, k_pad, *, tm_cap, tn_cap, tk_cap):
    assert tm_cap % 8 == 0 and tn_cap % 128 == 0 and tk_cap % 128 == 0
    tm = min(tm_cap, _round_up(rows, 8))
    # Keep tn 256-aligned when out_features allows (v6e/v7x MXU is 256-wide).
    tn = min(tn_cap, _round_up(out_features, 256)) if out_features > 128 else 128
    # tk must divide k_pad exactly (K blocks are always full).
    tk = min(tk_cap, k_pad)
    while k_pad % tk:
        tk -= 128

    # Keep both v7x TensorCores busy: aim for >= 2 blocks in the parallel
    # (M-blocks x N-blocks) grid when shrinking actually creates more blocks.
    while pl.cdiv(rows, tm) * pl.cdiv(out_features, tn) < 2:
        if tn > 128 and pl.cdiv(out_features, tn // 2) > pl.cdiv(out_features, tn):
            tn //= 2
        elif tm > 8 and pl.cdiv(rows, tm // 2) > pl.cdiv(rows, tm):
            tm //= 2
        else:
            break
    return tm, tn, tk


# ----------------------------------------------------------------------------
# Per-call apply
# ----------------------------------------------------------------------------
def zero_linear_apply(x, w_t, b_row, *, precision=None,
                      tm_cap=512, tn_cap=1024, tk_cap=2048,
                      force_pallas=False):
    """y = x @ W^T + b with (w_t, b_row) produced by prepare_weight().

    Mirrors ZeroLinear.forward: x is taken in f32 (x.float()), fed to the MXU
    in w_t's dtype (bf16 by default) and accumulated in f32.
    """
    orig_shape = x.shape
    in_features = orig_shape[-1]
    k_pad, out_features = w_t.shape
    assert in_features <= k_pad

    x = x.astype(jnp.float32)  # mirrors x.float()
    rows = 1
    for d in orig_shape[:-1]:
        rows *= d
    x2d = x.reshape(rows, in_features)

    # Tiny problems: per-grid-step overhead (~0.35us) dominates; let XLA fuse.
    if not force_pallas and rows * in_features * out_features < (1 << 20):
        out2d = x2d @ w_t[:in_features].astype(jnp.float32) + b_row
        return out2d.reshape(*orig_shape[:-1], out_features)

    feed_dtype = w_t.dtype
    x_feed = x2d.astype(feed_dtype)
    if in_features != k_pad:
        # Only K is physically zero-padded (and only when not already aligned).
        x_feed = jnp.zeros((rows, k_pad), feed_dtype).at[:, :in_features].set(x_feed)

    tm, tn, tk = _pick_tiles(rows, out_features, k_pad,
                             tm_cap=tm_cap, tn_cap=tn_cap, tk_cap=tk_cap)
    grid = (pl.cdiv(rows, tm), pl.cdiv(out_features, tn), k_pad // tk)

    itemsize = jnp.dtype(feed_dtype).itemsize
    cost = pl.CostEstimate(
        flops=2 * rows * out_features * k_pad,
        transcendentals=0,
        bytes_accessed=(rows * k_pad * itemsize * grid[1]            # x re-streamed per N block
                        + k_pad * out_features * itemsize * grid[0]  # w re-streamed per M block
                        + rows * out_features * 4                    # output written once
                        + out_features * 4 * grid[0]),               # bias per (i, j)
    )

    out2d = pl.pallas_call(
        functools.partial(_zero_linear_kernel, precision=precision),
        out_shape=jax.ShapeDtypeStruct((rows, out_features), jnp.float32),
        grid_spec=pltpu.PrefetchScalarGridSpec(
            num_scalar_prefetch=0,
            grid=grid,
            in_specs=[
                pl.BlockSpec((tm, tk), lambda i, j, k: (i, k)),   # x tile
                pl.BlockSpec((tk, tn), lambda i, j, k: (k, j)),   # W^T tile
                pl.BlockSpec((1, tn), lambda i, j, k: (0, j)),    # bias tile
                # NOTE: on v5e, pipeline_mode=pl.Buffered(3) on x/w can hide
                # exposed DMA if profiling shows it; default 2-deep is kept.
            ],
            out_specs=pl.BlockSpec((tm, tn), lambda i, j, k: (i, j)),
        ),
        compiler_params=pltpu.CompilerParams(
            dimension_semantics=("parallel", "parallel", "arbitrary"),
            vmem_limit_bytes=48 * 1024 * 1024,   # v7x-safe (<=~48 MiB of 64 MiB)
        ),
        cost_estimate=cost,
    )(x_feed, w_t, b_row)

    return out2d.reshape(*orig_shape[:-1], out_features)


# ----------------------------------------------------------------------------
# Module-like wrapper (caches the prepared weight, like the PyTorch module)
# ----------------------------------------------------------------------------
class ZeroLinear:
    """JAX/Pallas analogue of the PyTorch ZeroLinear module."""

    def __init__(self, in_features, out_features, *, input_dtype=jnp.bfloat16):
        self.in_features = in_features
        self.out_features = out_features
        self.input_dtype = input_dtype
        # Zero-initialized weight & bias, exactly as the PyTorch module.
        self.load_params(jnp.zeros((out_features, in_features), jnp.float32),
                         jnp.zeros((out_features,), jnp.float32))

    def load_params(self, weight, bias):
        # One-time prep (transpose, K zero-pad, cast) — cached, not per call.
        self.w_t, self.b_row = prepare_weight(weight, bias,
                                              input_dtype=self.input_dtype)

    def __call__(self, x, **kwargs):
        return zero_linear_apply(x, self.w_t, self.b_row, **kwargs)


if __name__ == "__main__":
    key = jax.random.PRNGKey(0)
    kx, kw, kb, kx2 = jax.random.split(key, 4)

    # Shapes implied by the module forward: x is [..., in_features].
    batch, seq, in_features, out_features = 2, 8, 32, 16
    x = jax.random.normal(kx, (batch, seq, in_features), dtype=jnp.float32)

    # --- Case 1: ZeroLinear semantics (weight = bias = 0) -> output is all zeros.
    layer = ZeroLinear(in_features, out_features)
    y0 = jax.block_until_ready(layer(x, force_pallas=True))
    assert y0.shape == (batch, seq, out_features), y0.shape
    assert y0.dtype == jnp.float32, y0.dtype
    assert jnp.allclose(y0, jnp.zeros_like(y0)), "ZeroLinear output must be all zeros"

    # --- Case 2: non-zero params exercise the bf16-feed matmul + bias path.
    weight1 = jax.random.normal(kw, (out_features, in_features), dtype=jnp.float32) * 0.1
    bias1 = jax.random.normal(kb, (out_features,), dtype=jnp.float32) * 0.1
    layer.load_params(weight1, bias1)
    y1 = jax.block_until_ready(layer(x, force_pallas=True))
    y1_ref = jnp.einsum("bsi,oi->bso", x, weight1) + bias1
    assert jnp.allclose(y1, y1_ref, atol=2e-2, rtol=2e-2), "mismatch vs reference (bf16 feed)"

    # --- Case 3: tiny tile caps to exercise multi-step K accumulation and
    #             masked partial M / N edge blocks (no physical M/N padding).
    in3, out3, rows3 = 256, 144, 20
    x3 = jax.random.normal(kx2, (rows3, in3), dtype=jnp.float32)
    w3 = jax.random.normal(kw, (out3, in3), dtype=jnp.float32) * 0.05
    b3 = jax.random.normal(kb, (out3,), dtype=jnp.float32) * 0.05
    w3_t, b3_row = prepare_weight(w3, b3)
    y3 = jax.block_until_ready(
        zero_linear_apply(x3, w3_t, b3_row,
                          tm_cap=8, tn_cap=128, tk_cap=128, force_pallas=True))
    y3_ref = x3 @ w3.T + b3
    assert jnp.allclose(y3, y3_ref, atol=5e-2, rtol=5e-2), "mismatch vs reference (tiled path)"

    print("KERNEL_OK")
</pallas_src>

<mosaic_0001>
module attributes {stable_mosaic.version = 11 : i64} {
  func.func @_zero_linear_kernel(%arg0: i32, %arg1: i32, %arg2: i32, %arg3: memref<8x128xbf16, #tpu.memory_space<vmem>>, %arg4: memref<128x128xbf16, #tpu.memory_space<vmem>>, %arg5: memref<1x128xf32, #tpu.memory_space<vmem>>, %arg6: memref<8x128xf32, #tpu.memory_space<vmem>>) attributes {dimension_semantics = [#tpu.dimension_semantics<parallel>, #tpu.dimension_semantics<parallel>, #tpu.dimension_semantics<arbitrary>], iteration_bounds = array<i64: 2, 1, 1>, scalar_prefetch = 0 : i64, scratch_operands = 0 : i64, tpu.core_type = #tpu.core_type<tc>, window_params = [{transform_indices = @transform_0, window_bounds = array<i64: 8, 128>}, {transform_indices = @transform_1, window_bounds = array<i64: 128, 128>}, {transform_indices = @transform_2, window_bounds = array<i64: 1, 128>}, {transform_indices = @transform_3, window_bounds = array<i64: 8, 128>}]} {
    %c0_i32 = arith.constant 0 : i32
    %0 = arith.cmpi eq, %arg2, %c0_i32 : i32
    %1 = arith.extui %0 : i1 to i32
    %c0_i32_0 = arith.constant 0 : i32
    %2 = arith.cmpi ne, %1, %c0_i32_0 : i32
    scf.if %2 {
      %c0_8 = arith.constant 0 : index
      %c0_9 = arith.constant 0 : index
      %9 = vector.load %arg5[%c0_8, %c0_9] : memref<1x128xf32, #tpu.memory_space<vmem>>, vector<1x128xf32>
      %10 = vector.shape_cast %9 : vector<1x128xf32> to vector<1x128xf32>
      %11 = vector.broadcast %10 : vector<1x128xf32> to vector<8x128xf32>
      %c0_10 = arith.constant 0 : index
      %c0_11 = arith.constant 0 : index
      %12 = vector.load %arg6[%c0_10, %c0_11] : memref<8x128xf32, #tpu.memory_space<vmem>>, vector<8x128xf32>
      tpu.vector_store %arg6[%c0_10, %c0_11], %11 {strides = array<i32>} : memref<8x128xf32, #tpu.memory_space<vmem>>, vector<8x128xf32>,
    } else {
    }
    %c0 = arith.constant 0 : index
    %c0_1 = arith.constant 0 : index
    %3 = vector.load %arg6[%c0, %c0_1] : memref<8x128xf32, #tpu.memory_space<vmem>>, vector<8x128xf32>
    %c0_2 = arith.constant 0 : index
    %c0_3 = arith.constant 0 : index
    %4 = vector.load %arg3[%c0_2, %c0_3] : memref<8x128xbf16, #tpu.memory_space<vmem>>, vector<8x128xbf16>
    %c0_4 = arith.constant 0 : index
    %c0_5 = arith.constant 0 : index
    %5 = vector.load %arg4[%c0_4, %c0_5] : memref<128x128xbf16, #tpu.memory_space<vmem>>, vector<128x128xbf16>
    %cst = arith.constant dense<0.000000e+00> : vector<8x128xf32>
    %6 = tpu.matmul %4, %5, %cst {dimension_numbers = #tpu.dot_dimension_numbers<[1], [0], [0], [1], [0, 0, 1, 1], [], []>} : vector<8x128xbf16>, vector<128x128xbf16>, vector<8x128xf32> -> vector<8x128xf32>
    %7 = arith.addf %3, %6 : vector<8x128xf32>
    %c0_6 = arith.constant 0 : index
    %c0_7 = arith.constant 0 : index
    %8 = vector.load %arg6[%c0_6, %c0_7] : memref<8x128xf32, #tpu.memory_space<vmem>>, vector<8x128xf32>
    tpu.vector_store %arg6[%c0_6, %c0_7], %7 {strides = array<i32>} : memref<8x128xf32, #tpu.memory_space<vmem>>, vector<8x128xf32>,
    return
  }
  func.func @transform_0(%arg0: i32, %arg1: i32, %arg2: i32) -> (i32, i32) {
    %c0_i32 = arith.constant 0 : i32
    return %arg0, %arg2 : i32, i32
  }
  func.func @transform_1(%arg0: i32, %arg1: i32, %arg2: i32) -> (i32, i32) {
    %c0_i32 = arith.constant 0 : i32
    return %arg2, %arg1 : i32, i32
  }
  func.func @transform_2(%arg0: i32, %arg1: i32, %arg2: i32) -> (i32, i32) {
    %c0_i32 = arith.constant 0 : i32
    %c0_i32_0 = arith.constant 0 : i32
    return %c0_i32, %arg1 : i32, i32
  }
  func.func @transform_3(%arg0: i32, %arg1: i32, %arg2: i32) -> (i32, i32) {
    %c0_i32 = arith.constant 0 : i32
    return %arg0, %arg1 : i32, i32
  }
}

</mosaic_0001>

<llo_original>
// kernel: tpu_custom_call.1
$region0: #{tpu_custom_call.1}
  #allocation0 [shape = 'u32[]', space=smem, size = 0x4, offset = 0x4, fixed_abs, tag = 'smem constant byte address 0x4 - core index']
  #allocation1 [shape = 'u32[144,128]{1,0:T(1,128)}', space=vmem, size = 0x12000, scoped, tag = 'internal scratch']
  %s0 = inlined_call_operand.vmem [shape: bf16[16,128], index: 0, kind: input, shape index: {}]
  %s1 = inlined_call_operand.vmem [shape: bf16[128,16], index: 1, kind: input, shape index: {}]
  %s2 = inlined_call_operand.vmem [shape: f32[1,16], index: 2, kind: input, shape index: {}]
  %s3 = inlined_call_operand.hbm [shape: f32[16,16], index: 3, kind: output, shape index: {}]
  %s4 = sld [smem:[#allocation0]]
  $region49: #{tpu_custom_call.1} parent=0
    _
  %s6 = ssub.s32 1, %s4
  %s7 = scalar_select 0, %s6, %s4
  $region1: #{tpu_custom_call.1} parent=0
    #allocation2 [shape = 'u8[8192]{0}', space=vmem, size = 0x2000, scoped, tag = 'output window, operand 0']
    #allocation3 [shape = 's32[2]{0}', space=sflag, size = 0x8, scoped, tag = 'scoped memory for tpu_custom_call.1']
    %8 = vsyncpa [#allocation3], 0
    %s9 = scalar_lea.sflag [#allocation3], 1
    %10 = vsyncpa %s9, 0
    loop: start=0, step=1, limit=4
    $region2: #{tpu_custom_call.1} parent=1 // loop_pre_header
      _
    $region3: #{tpu_custom_call.1} parent=1 // loop_header
      %s12 = sphi 0, %s16
      %p13 = scmp.ge.s32.totalorder %s12, 4
      %s19 = sphi 0, %s38
      %s20 = sphi 0, %s34
      %s21 = sphi 0, %s30
      %s22 = sphi 0, %s19
      %s23 = sphi 0, %s20
      %s24 = sphi 0, %s21
      %s25 = sphi 0, %s22
      %s26 = sphi 0, %s23
      %s27 = sphi 0, %s24
      %s43 = sphi 0, %s45
      %s46 = sphi 0, %s43
      %s47 = sphi 0, %s46
      %s63 = sphi 0, %s47
      %s71 = sphi 0, %s73
      %s74 = sphi 0, %s71
      %s75 = sphi 0, %s74
      %s91 = sphi 0, %s75
      %s97 = sphi 0, %s99
      %s100 = sphi 0, %s97
      %s101 = sphi 0, %s100
      %s117 = sphi 0, %s101
      %s125 = sphi 0, %s127
      %s128 = sphi 0, %s125
      %s129 = sphi 0, %s128
      %s145 = sphi 0, %s129
    $region4: #{tpu_custom_call.1} parent=1 // loop_header_branch
      %15 = sbr.rel (%p13) target = $region8
    $region5: #{tpu_custom_call.1} parent=1 // loop_body
      %s17 = ssub.s32 %s12, 1
      %s18 = ssub.s32 %s12, 2
      %s28 = sadd.s32 1, %s21
      %p29 = scmp.ge.s32.totalorder %s28, 1
      %s30 = scalar_select %p29, 0, %s28
      %s31 = sadd.s32 1, %s20
      %s32 = scalar_select %p29, %s31, %s20
      %p33 = scmp.ge.s32.totalorder %s32, 1
      %s34 = scalar_select %p33, 0, %s32
      %s35 = sadd.s32 1, %s19
      %s36 = scalar_select %p33, %s35, %s19
      %p37 = scmp.ge.s32.totalorder %s36, 2
      %s38 = scalar_select %p37, 0, %s36
      %s39 = ssub.s32 %s19, %s38
      %s40 = ssub.s32 %s21, %s30
      %s41 = sor.u32 %s39, %s40
      %p42 = scmp.eq.s32.totalorder %s41, 0
      %s44 = sadd.s32 %s43, 1
      %s45 = scalar_select %p42, %s43, %s44
      %p48 = pneg %p42
      %p49 = scmp.eq.s32.totalorder %s12, 1
      %p50 = por %p48, %p49
      %p51 = scmp.ne.s32.totalorder %s43, %s46
      %p52 = scmp.eq.s32.totalorder %s12, 0
      %p53 = por %p51, %p52
      %p54 = scmp.ne.s32.totalorder %s43, %s46
      %p55 = scmp.eq.s32.totalorder %s17, 1
      %p56 = por %p54, %p55
      %p57 = scmp.ne.s32.totalorder %s46, %s47
      %p58 = scmp.eq.s32.totalorder %s17, 0
      %p59 = por %p57, %p58
      %p60 = scmp.ne.s32.totalorder %s46, %s47
      %p61 = scmp.eq.s32.totalorder %s18, 1
      %p62 = por %p60, %p61
      %p64 = scmp.ne.s32.totalorder %s47, %s63
      %p65 = scmp.eq.s32.totalorder %s18, 0
      %p66 = por %p64, %p65
      %s67 = ssub.s32 %s21, %s30
      %s68 = ssub.s32 %s20, %s34
      %s69 = sor.u32 %s67, %s68
      %p70 = scmp.eq.s32.totalorder %s69, 0
      %s72 = sadd.s32 %s71, 1
      %s73 = scalar_select %p70, %s71, %s72
      %p76 = pneg %p70
      %p77 = scmp.eq.s32.totalorder %s12, 1
      %p78 = por %p76, %p77
      %p79 = scmp.ne.s32.totalorder %s71, %s74
      %p80 = scmp.eq.s32.totalorder %s12, 0
      %p81 = por %p79, %p80
      %p82 = scmp.ne.s32.totalorder %s71, %s74
      %p83 = scmp.eq.s32.totalorder %s17, 1
      %p84 = por %p82, %p83
      %p85 = scmp.ne.s32.totalorder %s74, %s75
      %p86 = scmp.eq.s32.totalorder %s17, 0
      %p87 = por %p85, %p86
      %p88 = scmp.ne.s32.totalorder %s74, %s75
      %p89 = scmp.eq.s32.totalorder %s18, 1
      %p90 = por %p88, %p89
      %p92 = scmp.ne.s32.totalorder %s75, %s91
      %p93 = scmp.eq.s32.totalorder %s18, 0
      %p94 = por %p92, %p93
      %s95 = ssub.s32 %s20, %s34
      %p96 = scmp.eq.s32.totalorder %s95, 0
      %s98 = sadd.s32 %s97, 1
      %s99 = scalar_select %p96, %s97, %s98
      %p102 = pneg %p96
      %p103 = scmp.eq.s32.totalorder %s12, 1
      %p104 = por %p102, %p103
      %p105 = scmp.ne.s32.totalorder %s97, %s100
      %p106 = scmp.eq.s32.totalorder %s12, 0
      %p107 = por %p105, %p106
      %p108 = scmp.ne.s32.totalorder %s97, %s100
      %p109 = scmp.eq.s32.totalorder %s17, 1
      %p110 = por %p108, %p109
      %p111 = scmp.ne.s32.totalorder %s100, %s101
      %p112 = scmp.eq.s32.totalorder %s17, 0
      %p113 = por %p111, %p112
      %p114 = scmp.ne.s32.totalorder %s100, %s101
      %p115 = scmp.eq.s32.totalorder %s18, 1
      %p116 = por %p114, %p115
      %p118 = scmp.ne.s32.totalorder %s101, %s117
      %p119 = scmp.eq.s32.totalorder %s18, 0
      %p120 = por %p118, %p119
      %s121 = ssub.s32 %s19, %s38
      %s122 = ssub.s32 %s20, %s34
      %s123 = sor.u32 %s121, %s122
      %p124 = scmp.eq.s32.totalorder %s123, 0
      %s126 = sadd.s32 %s125, 1
      %s127 = scalar_select %p124, %s125, %s126
      %p130 = pneg %p124
      %p131 = scmp.eq.s32.totalorder %s12, 1
      %p132 = por %p130, %p131
      %p133 = scmp.ne.s32.totalorder %s125, %s128
      %p134 = scmp.eq.s32.totalorder %s12, 0
      %p135 = por %p133, %p134
      %p136 = scmp.ne.s32.totalorder %s125, %s128
      %p137 = scmp.eq.s32.totalorder %s17, 1
      %p138 = por %p136, %p137
      %p139 = scmp.ne.s32.totalorder %s128, %s129
      %p140 = scmp.eq.s32.totalorder %s17, 0
      %p141 = por %p139, %p140
      %p142 = scmp.ne.s32.totalorder %s128, %s129
      %p143 = scmp.eq.s32.totalorder %s18, 1
      %p144 = por %p142, %p143
      %p146 = scmp.ne.s32.totalorder %s129, %s145
      %p147 = scmp.eq.s32.totalorder %s18, 0
      %p148 = por %p146, %p147
      %p149 = scmp.le.s32.totalorder 1, %s12
      %p150 = scmp.lt.s32.totalorder %s12, 3
      %p151 = pnand %p149, %p150
      %p152 = pneg %p151
      // Predicated region
      $region9: #{tpu_custom_call.1} parent=5 // pred_check
        _
      $region10: #{tpu_custom_call.1} parent=5 // pred_check_branch
        %154 = sbr.rel (%p151) target = $region12
      $region11: #{tpu_custom_call.1} parent=5 // pred_region
        %s155 = ssub.s32 %s12, 1
        // Predicated region
        $region13: #{tpu_custom_call.1} parent=11 // pred_check
          %p156 = pneg %p87
        $region14: #{tpu_custom_call.1} parent=11 // pred_check_branch
          %158 = sbr.rel (%p156) target = $region16
        $region15: #{tpu_custom_call.1} parent=11 // pred_region
          %s159 = smul.u32 16, %s24
          %p160 = scmp.lt.s32.totalorder %s159, 15
          %s161 = scalar_select %p160, %s159, 15
          %p162 = scmp.lt.s32.totalorder %s23, 0
          %s163 = scalar_select %p162, %s23, 0
          %s164 = sadd.s32 %s163, %s161
          %s165 = smul.addr %s164, 4
          %s166 = scalar_lea.vmem %s1, %s165
          %s167 = smul.u32 16, %s24
        $region16: #{tpu_custom_call.1} parent=11 // pred_fallthru
          _
        // Predicated region
        $region17: #{tpu_custom_call.1} parent=11 // pred_check
          %p168 = pneg %p113
        $region18: #{tpu_custom_call.1} parent=11 // pred_check_branch
          %170 = sbr.rel (%p168) target = $region20
        $region19: #{tpu_custom_call.1} parent=11 // pred_region
          %p171 = scmp.lt.s32.totalorder %s23, 0
          %s172 = scalar_select %p171, %s23, 0
          %s173 = scalar_lea.vmem %s2, %s172
        $region20: #{tpu_custom_call.1} parent=11 // pred_fallthru
          _
      $region12: #{tpu_custom_call.1} parent=5 // pred_fallthru
        _
      %p174 = scmp.lt.s32.totalorder %s12, 2
      // Predicated region
      $region21: #{tpu_custom_call.1} parent=5 // pred_check
        %p175 = pneg %p174
      $region22: #{tpu_custom_call.1} parent=5 // pred_check_branch
        %177 = sbr.rel (%p175) target = $region24
      $region23: #{tpu_custom_call.1} parent=5 // pred_region
        // Predicated region
        $region25: #{tpu_custom_call.1} parent=23 // pred_check
          %p178 = pneg %p53
        $region26: #{tpu_custom_call.1} parent=23 // pred_check_branch
          %180 = sbr.rel (%p178) target = $region28
        $region27: #{tpu_custom_call.1} parent=23 // pred_region
          %p181 = scmp.lt.s32.totalorder %s19, 1
          %s182 = scalar_select %p181, %s19, 1
          %p183 = scmp.lt.s32.totalorder %s21, 0
          %s184 = scalar_select %p183, %s21, 0
          %s185 = sadd.s32 %s184, %s182
          %s186 = smul.addr %s185, 4
          %s187 = scalar_lea.vmem %s0, %s186
        $region28: #{tpu_custom_call.1} parent=23 // pred_fallthru
          _
      $region24: #{tpu_custom_call.1} parent=5 // pred_fallthru
        _
      %p188 = scmp.le.s32.totalorder 1, %s12
      %p189 = scmp.lt.s32.totalorder %s12, 3
      %p190 = pnand %p188, %p189
      %p191 = pneg %p190
      // Predicated region
      $region29: #{tpu_custom_call.1} parent=5 // pred_check
        _
      $region30: #{tpu_custom_call.1} parent=5 // pred_check_branch
        %193 = sbr.rel (%p190) target = $region32
      $region31: #{tpu_custom_call.1} parent=5 // pred_region
        %s194 = ssub.s32 %s12, 1
        %p195 = scmp.lt.s32.totalorder %s22, 1
        %s196 = scalar_select %p195, %s22, 1
        %p197 = scmp.lt.s32.totalorder %s24, 0
        %s198 = scalar_select %p197, %s24, 0
        %s199 = sadd.s32 %s198, %s196
        %s200 = smul.addr %s199, 4
        %s201 = scalar_lea.vmem %s0, %s200
        %p202 = pneg %p59
        %p203 = pneg %p56
        %s204 = smul.u32 16, %s24
        %p205 = scmp.lt.s32.totalorder %s204, 15
        %s206 = scalar_select %p205, %s204, 15
        %p207 = scmp.lt.s32.totalorder %s23, 0
        %s208 = scalar_select %p207, %s23, 0
        %s209 = sadd.s32 %s208, %s206
        %s210 = smul.addr %s209, 4
        %s211 = scalar_lea.vmem %s1, %s210
        %p212 = pneg %p87
        %p213 = pneg %p84
        %p214 = scmp.lt.s32.totalorder %s23, 0
        %s215 = scalar_select %p214, %s23, 0
        %s216 = scalar_lea.vmem %s2, %s215
        %p217 = pneg %p113
        %p218 = pneg %p110
        %p219 = pneg %p141
        %p220 = pneg %p138
        %s221 = sand.u32 %s128, 1
        %s222 = scalar_lea.sflag [#allocation3], %s221
        %s223 = sand.u32 %s128, 1
        %s224 = smul.addr %s223, 8
        %s225 = scalar_lea.vmem [#allocation2], %s224
        %p226 = scmp.lt.s32.totalorder %s22, 1
        %s227 = scalar_select %p226, %s22, 1
        %p228 = scmp.lt.s32.totalorder %s24, 0
        %s229 = scalar_select %p228, %s24, 0
        %s230 = sadd.s32 %s229, %s227
        %s231 = smul.addr %s230, 4
        %s232 = scalar_lea.vmem %s0, %s231
        %s233 = smul.u32 16, %s24
        %p234 = scmp.lt.s32.totalorder %s233, 15
        %s235 = scalar_select %p234, %s233, 15
        %p236 = scmp.lt.s32.totalorder %s23, 0
        %s237 = scalar_select %p236, %s23, 0
        %s238 = sadd.s32 %s237, %s235
        %s239 = smul.addr %s238, 4
        %s240 = scalar_lea.vmem %s1, %s239
        %s241 = smul.u32 16, %s24
        %p242 = scmp.lt.s32.totalorder %s23, 0
        %s243 = scalar_select %p242, %s23, 0
        %s244 = scalar_lea.vmem %s2, %s243
        %p246 = scmp.eq.s32.totalorder %s24, 0
        // Predicated region
        $region33: #{tpu_custom_call.1} parent=31 // pred_check
          %p247 = pneg %p246
        $region34: #{tpu_custom_call.1} parent=31 // pred_check_branch
          %249 = sbr.rel (%p247) target = $region36
        $region35: #{tpu_custom_call.1} parent=31 // pred_region
          %v250 = vld [vmem:[%s244] sm:$0x1]
          %v252 = vlaneseq
          %v253 = vshrl.u32 %v252, 7
          %v254 = vsub.s32 0, %v253
          %v255 = vrot.slane %v250, %v254
          %257 = vst [vmem:[%s225] sm:$0xff] %v255
        $region36: #{tpu_custom_call.1} parent=31 // pred_fallthru
          _
        %v258 = vld [vmem:[%s225] sm:$0xff]
        %v259 = vld [vmem:[%s232] sm:$0xf]
        %v260 = vld [vmem:[%s240] sm:$0xf]
        %v261 = vld [vmem:[%s240 + $0x4] sm:$0xf]
        %v262 = vld [vmem:[%s240 + $0x8] sm:$0xf]
        %v263 = vld [vmem:[%s240 + $0xc] sm:$0xf]
        %v264 = vld [vmem:[%s240 + $0x10] sm:$0xf]
        %v265 = vld [vmem:[%s240 + $0x14] sm:$0xf]
        %v266 = vld [vmem:[%s240 + $0x18] sm:$0xf]
        %v267 = vld [vmem:[%s240 + $0x1c] sm:$0xf]
        %v268 = vld [vmem:[%s240 + $0x20] sm:$0xf]
        %v269 = vld [vmem:[%s240 + $0x24] sm:$0xf]
        %v270 = vld [vmem:[%s240 + $0x28] sm:$0xf]
        %v271 = vld [vmem:[%s240 + $0x2c] sm:$0xf]
        %v272 = vld [vmem:[%s240 + $0x30] sm:$0xf]
        %v273 = vld [vmem:[%s240 + $0x34] sm:$0xf]
        %v274 = vld [vmem:[%s240 + $0x38] sm:$0xf]
        %v275 = vld [vmem:[%s240 + $0x3c] sm:$0xf]
        %v292 = vunpack.c.l.b16 %v260
        %v293 = vunpack.c.l.b16 %v261
        %v294 = vunpack.c.l.b16 %v262
        %v295 = vunpack.c.l.b16 %v263
        %v296 = vunpack.c.l.b16 %v264
        %v297 = vunpack.c.l.b16 %v265
        %v298 = vunpack.c.l.b16 %v266
        %v299 = vunpack.c.l.b16 %v267
        %v300 = vunpack.c.l.b16 %v268
        %v301 = vunpack.c.l.b16 %v269
        %v302 = vunpack.c.l.b16 %v270
        %v303 = vunpack.c.l.b16 %v271
        %v304 = vunpack.c.l.b16 %v272
        %v305 = vunpack.c.l.b16 %v273
        %v306 = vunpack.c.l.b16 %v274
        %v307 = vunpack.c.l.b16 %v275
        %v308 = vpack.c.b16 %v293, %v292
        %v309 = vpack.c.b16 %v295, %v294
        %v310 = vpack.c.b16 %v297, %v296
        %v311 = vpack.c.b16 %v299, %v298
        %v312 = vpack.c.b16 %v301, %v300
        %v313 = vpack.c.b16 %v303, %v302
        %v314 = vpack.c.b16 %v305, %v304
        %v315 = vpack.c.b16 %v307, %v306
        %324 = vmatprep.subr.bf16.mxu0 0
        %325 = vmatpush1.bf16.msra.mxu0 %v308
        %326 = vmatprep.subr.bf16.mxu0 0
        %327 = vmatpush1.bf16.msra.mxu0 %v309
        %328 = vmatprep.subr.bf16.mxu0 0
        %329 = vmatpush1.bf16.msra.mxu0 %v310
        %330 = vmatprep.subr.bf16.mxu0 0
        %331 = vmatpush1.bf16.msra.mxu0 %v311
        %332 = vmatprep.subr.bf16.mxu0 0
        %333 = vmatpush1.bf16.msra.mxu0 %v312
        %334 = vmatprep.subr.bf16.mxu0 0
        %335 = vmatpush1.bf16.msra.mxu0 %v313
        %336 = vmatprep.subr.bf16.mxu0 0
        %337 = vmatpush1.bf16.msra.mxu0 %v314
        %338 = vmatprep.subr.bf16.mxu0 0
        %339 = vmatpush1.bf16.msra.mxu0 %v315
        %340 = vmatprep.subr.bf16.mxu0 0
        %341 = vmatpush1.bf16.msra.mxu0 0
        %342 = vmatprep.subr.bf16.mxu0 0
        %343 = vmatpush1.bf16.msra.mxu0 0
        %344 = vmatprep.subr.bf16.mxu0 0
        %345 = vmatpush1.bf16.msra.mxu0 0
        %346 = vmatprep.subr.bf16.mxu0 0
        %347 = vmatpush1.bf16.msra.mxu0 0
        %348 = vmatprep.subr.bf16.mxu0 0
        %349 = vmatpush1.bf16.msra.mxu0 0
        %350 = vmatprep.subr.bf16.mxu0 0
        %351 = vmatpush1.bf16.msra.mxu0 0
        %352 = vmatprep.subr.bf16.mxu0 0
        %353 = vmatpush1.bf16.msra.mxu0 0
        %354 = vmatprep.subr.bf16.mxu0 0
        %355 = vmatpush1.bf16.msra.mxu0 0
        %356 = vmatprep.mubr.bf16.mxu0 0
        %357 = vmatmul.mubr.bf16.gmra.mrb[0].mxu0 %v259
        %v358 = vpop.f32.mrb[0].mxu0
        %v359 = vadd.f32 0.0, %v358
        %v360 = vpop.f32.mrb[0].mxu0
        %v361 = vpop.f32.mrb[0].mxu0
        %v362 = vpop.f32.mrb[0].mxu0
        %363 = vdwg.mxu0
        %v364 = vadd.f32 %v258, %v359
        %365 = vst [vmem:[%s225] sm:$0xff] %v364
        %s366 = sand.u32 %s128, 1
        %s367 = scalar_lea.sflag [#allocation3], %s366
        %s368 = sand.u32 %s128, 1
        %s369 = smul.addr %s368, 8
        %s370 = scalar_lea.vmem [#allocation2], %s369
        // Predicated region
        $region37: #{tpu_custom_call.1} parent=31 // pred_check
          %p371 = pneg %p138
        $region38: #{tpu_custom_call.1} parent=31 // pred_check_branch
          %373 = sbr.rel (%p371) target = $region40
        $region39: #{tpu_custom_call.1} parent=31 // pred_region
          %s375 = ssub.s32 128, 128
          %376 = vsyncadd %s367, %s375
          %s377 = sadd.s32 %s23, %s22
          %s378 = smul.addr %s377, 128
          %s379 = scalar_lea.hbm %s3, %s378
          %s381 = sshll.u32 %s370, 4
          %s382 = int_to_ptr.vmem [resolvable:$true] %s381
          %384 = dma.vmem_to_hbm [thread:$0]  %s382, 128, %s379, %s367
        $region40: #{tpu_custom_call.1} parent=31 // pred_fallthru
          _
      $region32: #{tpu_custom_call.1} parent=5 // pred_fallthru
        _
      %p385 = scmp.le.s32.totalorder 2, %s12
      // Predicated region
      $region41: #{tpu_custom_call.1} parent=5 // pred_check
        %p386 = pneg %p385
      $region42: #{tpu_custom_call.1} parent=5 // pred_check_branch
        %388 = sbr.rel (%p386) target = $region44
      $region43: #{tpu_custom_call.1} parent=5 // pred_region
        %s389 = ssub.s32 %s12, 2
        // Predicated region
        $region45: #{tpu_custom_call.1} parent=43 // pred_check
          %p390 = pneg %p144
        $region46: #{tpu_custom_call.1} parent=43 // pred_check_branch
          %392 = sbr.rel (%p390) target = $region48
        $region47: #{tpu_custom_call.1} parent=43 // pred_region
          %s393 = sand.u32 %s129, 1
          %s394 = scalar_lea.sflag [#allocation3], %s393
          %s395 = sand.u32 %s129, 1
          %s396 = smul.addr %s395, 8
          %s397 = scalar_lea.vmem [#allocation2], %s396
          %398 = dma.done %s394, 128
        $region48: #{tpu_custom_call.1} parent=43 // pred_fallthru
          _
      $region44: #{tpu_custom_call.1} parent=5 // pred_fallthru
        _
    $region6: #{tpu_custom_call.1} parent=1 // loop_footer
      %s16 = sadd.s32 1, %s12
    $region7: #{tpu_custom_call.1} parent=1 // loop_footer_branch
      %11 = sbr.rel target = $region3
    $region8: #{tpu_custom_call.1} parent=1 // loop_exit
      _
    %399 = vsyncpa [#allocation3], 1
    %s400 = scalar_lea.sflag [#allocation3], 1
    %401 = vsyncpa %s400, 1

</llo_original>
